<compile_context>
chip_gen: v7x
topology: tpu7x:2x2x1
jax: 0.10.0
libtpu: 0.0.40
codegen_flags: <defaults>
</compile_context>

<pallas_src>
import functools

import jax
import jax.numpy as jnp
from jax.experimental import pallas as pl
from jax.experimental.pallas import tpu as pltpu

_LANE = 128
_SUBLANE = 8


def _round_up(a, b):
    return -(-a // b) * b


def _vmem_limit_bytes():
    try:
        cap = int(pltpu.get_tpu_info().vmem_capacity_bytes)
    except Exception:
        cap = 64 * 1024 * 1024            # conservative fallback (v7x per-core VMEM)
    cap = min(max(cap, 32 * 1024 * 1024), 256 * 1024 * 1024)
    return (3 * cap) // 4                 # 48 MiB on v7x, 96 MiB on v5e/v6e


def _corr2d_kernel(x_main_ref, x_halo_ref, w_ref, b_ref, o_ref, *, kh, kw, halo):
    """One row-tile of the cross-correlation.

    x_main_ref : (TILE_OH, W)  f32 VMEM   rows [i*TILE_OH, (i+1)*TILE_OH)
    x_halo_ref : (HALO,    W)  f32 VMEM   rows [(i+1)*TILE_OH, ... + HALO)
    w_ref      : (KH, KW)      f32 SMEM   scalar taps
    b_ref      : (1,)          f32 SMEM   scalar bias
    o_ref      : (TILE_OH, OW) f32 VMEM
    """
    tile_oh, ow = o_ref.shape
    top = tile_oh - halo                  # output rows that never need the halo
    bias = b_ref[0]

    xm = x_main_ref[...]                  # (tile_oh, W)
    xh = x_halo_ref[...]                  # (halo, W)

    if top > 0:
        # KW lane-shifted, OW-wide views of the main block (column shifts are
        # hoisted out of the tap loops; only the consumed window is built).
        sm = [xm[:, dj:dj + ow] for dj in range(kw)]
        # Per-row weighted sums: tmp[di][p, j] = sum_dj w[di, dj] * x[p, j + dj].
        # All sublane-aligned VPU work.
        tmp = []
        for di in range(kh):
            t = w_ref[di, 0] * sm[0]
            for dj in range(1, kw):
                t = t + w_ref[di, dj] * sm[dj]
            tmp.append(t)
        # Only KH sublane-misaligned slices remain (instead of KH*KW).
        acc = tmp[0][0:top, :]
        for di in range(1, kh):
            acc = acc + tmp[di][di:di + top, :]
        o_ref[0:top, :] = acc + bias

    # Bottom `halo` output rows: the only ones that need rows from the halo
    # block.  The strip is tiny (2*halo rows), so a naive tap loop is fine.
    strip = jnp.concatenate([xm[top:, :], xh], axis=0)     # (2*halo, W)
    bot = w_ref[0, 0] * strip[0:halo, 0:ow]
    for di in range(kh):
        for dj in range(kw):
            if di == 0 and dj == 0:
                continue
            bot = bot + w_ref[di, dj] * strip[di:di + halo, dj:dj + ow]
    o_ref[top:, :] = bot + bias


def conv2d_forward(x, weight, bias, *, tile_oh=None):
    """Pallas equivalent of Conv2D.forward: corr2d(x, weight) + bias."""
    x = jnp.asarray(x, jnp.float32)
    weight = jnp.asarray(weight, jnp.float32)
    bias = jnp.asarray(bias, jnp.float32).reshape((1,))

    H, W = x.shape
    KH, KW = weight.shape
    OH, OW = H - KH + 1, W - KW + 1
    assert OH > 0 and OW > 0

    halo = _round_up(max(KH - 1, 1), _SUBLANE)
    vmem_limit = _vmem_limit_bytes()

    if tile_oh is None:
        w_c = _round_up(W, _LANE)
        ow_c = _round_up(OW, _LANE)
        # Honest per-step budget: double-buffered main/halo/output blocks plus
        # ~(KH + KW + 2) OW-wide in-kernel temporaries (padded lane layout).
        budget = (3 * vmem_limit) // 4
        per_row = 4 * (2 * w_c + (KH + KW + 4) * ow_c)
        rows = max(halo, (budget - 8 * halo * w_c) // per_row)
        # >= 2 grid steps whenever possible so v7x megacore uses both cores.
        rows = min(rows, 1024, _round_up(pl.cdiv(OH, 2), halo))
        tile_oh = max(halo, (rows // halo) * halo)
    else:
        tile_oh = max(halo, _round_up(tile_oh, halo))

    n_tiles = pl.cdiv(OH, tile_oh)
    halo_blocks = tile_oh // halo              # halo-block stride per row tile
    h_last = max((H - 1) // halo, 0)           # last halo block starting in-bounds

    # TODO(synk): for large taps (e.g. 7x7) an MXU im2col/Toeplitz formulation
    # would beat this VPU accumulation on v6e/v7x.
    kernel = functools.partial(_corr2d_kernel, kh=KH, kw=KW, halo=halo)
    return pl.pallas_call(
        kernel,
        out_shape=jax.ShapeDtypeStruct((OH, OW), jnp.float32),
        grid=(n_tiles,),
        in_specs=[
            # Main row tile (lane axis = full W -> no wrapper-side padding).
            pl.BlockSpec((tile_oh, W), lambda i: (i, 0)),
            # Halo: the rows directly below the main tile.  Clamped so the
            # block always starts inside the input; whenever the clamp kicks
            # in, the halo only feeds masked (>= OH) output rows.
            pl.BlockSpec((halo, W),
                         lambda i: (jnp.minimum((i + 1) * halo_blocks, h_last), 0)),
            # Scalar taps and bias in SMEM.
            pl.BlockSpec((KH, KW), lambda i: (0, 0),
                         memory_space=pltpu.MemorySpace.SMEM),
            pl.BlockSpec((1,), lambda i: (0,),
                         memory_space=pltpu.MemorySpace.SMEM),
        ],
        # Output written directly at (OH, OW): only the tail vreg per row gets
        # a masked store and the boundary row-block is masked by Pallas.
        out_specs=pl.BlockSpec((tile_oh, OW), lambda i: (i, 0)),
        compiler_params=pltpu.CompilerParams(
            dimension_semantics=("parallel",),
            vmem_limit_bytes=vmem_limit,
        ),
        cost_estimate=pl.CostEstimate(
            flops=2 * KH * KW * OH * OW,
            transcendentals=0,
            bytes_accessed=4 * (H * W + OH * OW + n_tiles * halo * W),
        ),
    )(x, x, weight, bias)


def _corr2d_ref(x, k, b):
    """Pure-JAX reference mirroring the PyTorch nested-loop corr2d."""
    kh, kw = k.shape
    oh, ow = x.shape[0] - kh + 1, x.shape[1] - kw + 1
    out = jnp.zeros((oh, ow), jnp.float32)
    for di in range(kh):
        for dj in range(kw):
            out = out + k[di, dj] * x[di:di + oh, dj:dj + ow]
    return out + b[0]


if __name__ == "__main__":
    key = jax.random.PRNGKey(0)
    kx, kw_, kb, kx2, kw2, kb2, kx3, kw3, kb3 = jax.random.split(key, 9)

    # Shapes consistent with the module's example: X = torch.rand(8, 8), 3x3 kernel.
    x = jax.random.uniform(kx, (8, 8), dtype=jnp.float32)
    weight = jax.random.normal(kw_, (3, 3), dtype=jnp.float32)   # nn.Parameter(torch.randn(kernel_size))
    bias = jax.random.normal(kb, (1,), dtype=jnp.float32)        # nn.Parameter(torch.randn(1))
    out = jax.block_until_ready(conv2d_forward(x, weight, bias))
    ref = _corr2d_ref(x, weight, bias)
    assert out.shape == (6, 6)
    assert jnp.allclose(out, ref, atol=1e-4, rtol=1e-4)

    # Multi-tile path (exercises the row-halo handoff across grid steps).
    x2 = jax.random.uniform(kx2, (40, 33), dtype=jnp.float32)
    weight2 = jax.random.normal(kw2, (5, 4), dtype=jnp.float32)
    bias2 = jax.random.normal(kb2, (1,), dtype=jnp.float32)
    out2 = jax.block_until_ready(conv2d_forward(x2, weight2, bias2, tile_oh=16))
    ref2 = _corr2d_ref(x2, weight2, bias2)
    assert out2.shape == (36, 30)
    assert jnp.allclose(out2, ref2, atol=1e-4, rtol=1e-4)

    # Wider input: multiple lane vregs, non-128-multiple width, partial
    # boundary blocks, auto tile selection.
    x3 = jax.random.uniform(kx3, (200, 300), dtype=jnp.float32)
    weight3 = jax.random.normal(kw3, (3, 3), dtype=jnp.float32)
    bias3 = jax.random.normal(kb3, (1,), dtype=jnp.float32)
    out3 = jax.block_until_ready(conv2d_forward(x3, weight3, bias3))
    ref3 = _corr2d_ref(x3, weight3, bias3)
    assert out3.shape == (198, 298)
    assert jnp.allclose(out3, ref3, atol=1e-4, rtol=1e-4)

    print("KERNEL_OK")
</pallas_src>

<mosaic_0001>
module attributes {stable_mosaic.version = 11 : i64} {
  func.func @_corr2d_kernel(%arg0: i32, %arg1: memref<8x8xf32, #tpu.memory_space<vmem>>, %arg2: memref<8x8xf32, #tpu.memory_space<vmem>>, %arg3: memref<3x3xf32, #tpu.memory_space<smem>>, %arg4: memref<1xf32, #tpu.memory_space<smem>>, %arg5: memref<8x6xf32, #tpu.memory_space<vmem>>) attributes {dimension_semantics = [#tpu.dimension_semantics<parallel>], iteration_bounds = array<i64: 1>, scalar_prefetch = 0 : i64, scratch_operands = 0 : i64, tpu.core_type = #tpu.core_type<tc>, window_params = [{transform_indices = @transform_0, window_bounds = array<i64: 8, 8>}, {transform_indices = @transform_1, window_bounds = array<i64: 8, 8>}, {transform_indices = @transform_2, window_bounds = array<i64: 3, 3>}, {transform_indices = @transform_3, window_bounds = array<i64: 1>}, {transform_indices = @transform_4, window_bounds = array<i64: 8, 6>}]} {
    %c0 = arith.constant 0 : index
    %0 = memref.load %arg4[%c0] : memref<1xf32, #tpu.memory_space<smem>>
    %c0_0 = arith.constant 0 : index
    %c0_1 = arith.constant 0 : index
    %1 = vector.load %arg1[%c0_0, %c0_1] : memref<8x8xf32, #tpu.memory_space<vmem>>, vector<8x8xf32>
    %c0_2 = arith.constant 0 : index
    %c0_3 = arith.constant 0 : index
    %2 = vector.load %arg2[%c0_2, %c0_3] : memref<8x8xf32, #tpu.memory_space<vmem>>, vector<8x8xf32>
    %3 = tpu.concatenate %1, %2 in 0 : vector<8x8xf32>, vector<8x8xf32> -> vector<16x8xf32>
    %c0_4 = arith.constant 0 : index
    %c0_5 = arith.constant 0 : index
    %4 = memref.load %arg3[%c0_4, %c0_5] : memref<3x3xf32, #tpu.memory_space<smem>>
    %5 = vector.extract_strided_slice %3 {offsets = [0, 0], sizes = [8, 6], strides = [1, 1]} : vector<16x8xf32> to vector<8x6xf32>
    %6 = vector.broadcast %4 : f32 to vector<8x6xf32>
    %7 = arith.mulf %6, %5 : vector<8x6xf32>
    %c0_6 = arith.constant 0 : index
    %c1 = arith.constant 1 : index
    %8 = memref.load %arg3[%c0_6, %c1] : memref<3x3xf32, #tpu.memory_space<smem>>
    %9 = vector.extract_strided_slice %3 {offsets = [0, 1], sizes = [8, 6], strides = [1, 1]} : vector<16x8xf32> to vector<8x6xf32>
    %10 = vector.broadcast %8 : f32 to vector<8x6xf32>
    %11 = arith.mulf %10, %9 : vector<8x6xf32>
    %12 = arith.addf %7, %11 : vector<8x6xf32>
    %c0_7 = arith.constant 0 : index
    %c2 = arith.constant 2 : index
    %13 = memref.load %arg3[%c0_7, %c2] : memref<3x3xf32, #tpu.memory_space<smem>>
    %14 = vector.extract_strided_slice %3 {offsets = [0, 2], sizes = [8, 6], strides = [1, 1]} : vector<16x8xf32> to vector<8x6xf32>
    %15 = vector.broadcast %13 : f32 to vector<8x6xf32>
    %16 = arith.mulf %15, %14 : vector<8x6xf32>
    %17 = arith.addf %12, %16 : vector<8x6xf32>
    %c1_8 = arith.constant 1 : index
    %c0_9 = arith.constant 0 : index
    %18 = memref.load %arg3[%c1_8, %c0_9] : memref<3x3xf32, #tpu.memory_space<smem>>
    %19 = vector.extract_strided_slice %3 {offsets = [1, 0], sizes = [8, 6], strides = [1, 1]} : vector<16x8xf32> to vector<8x6xf32>
    %20 = vector.broadcast %18 : f32 to vector<8x6xf32>
    %21 = arith.mulf %20, %19 : vector<8x6xf32>
    %22 = arith.addf %17, %21 : vector<8x6xf32>
    %c1_10 = arith.constant 1 : index
    %c1_11 = arith.constant 1 : index
    %23 = memref.load %arg3[%c1_10, %c1_11] : memref<3x3xf32, #tpu.memory_space<smem>>
    %24 = vector.extract_strided_slice %3 {offsets = [1, 1], sizes = [8, 6], strides = [1, 1]} : vector<16x8xf32> to vector<8x6xf32>
    %25 = vector.broadcast %23 : f32 to vector<8x6xf32>
    %26 = arith.mulf %25, %24 : vector<8x6xf32>
    %27 = arith.addf %22, %26 : vector<8x6xf32>
    %c1_12 = arith.constant 1 : index
    %c2_13 = arith.constant 2 : index
    %28 = memref.load %arg3[%c1_12, %c2_13] : memref<3x3xf32, #tpu.memory_space<smem>>
    %29 = vector.extract_strided_slice %3 {offsets = [1, 2], sizes = [8, 6], strides = [1, 1]} : vector<16x8xf32> to vector<8x6xf32>
    %30 = vector.broadcast %28 : f32 to vector<8x6xf32>
    %31 = arith.mulf %30, %29 : vector<8x6xf32>
    %32 = arith.addf %27, %31 : vector<8x6xf32>
    %c2_14 = arith.constant 2 : index
    %c0_15 = arith.constant 0 : index
    %33 = memref.load %arg3[%c2_14, %c0_15] : memref<3x3xf32, #tpu.memory_space<smem>>
    %34 = vector.extract_strided_slice %3 {offsets = [2, 0], sizes = [8, 6], strides = [1, 1]} : vector<16x8xf32> to vector<8x6xf32>
    %35 = vector.broadcast %33 : f32 to vector<8x6xf32>
    %36 = arith.mulf %35, %34 : vector<8x6xf32>
    %37 = arith.addf %32, %36 : vector<8x6xf32>
    %c2_16 = arith.constant 2 : index
    %c1_17 = arith.constant 1 : index
    %38 = memref.load %arg3[%c2_16, %c1_17] : memref<3x3xf32, #tpu.memory_space<smem>>
    %39 = vector.extract_strided_slice %3 {offsets = [2, 1], sizes = [8, 6], strides = [1, 1]} : vector<16x8xf32> to vector<8x6xf32>
    %40 = vector.broadcast %38 : f32 to vector<8x6xf32>
    %41 = arith.mulf %40, %39 : vector<8x6xf32>
    %42 = arith.addf %37, %41 : vector<8x6xf32>
    %c2_18 = arith.constant 2 : index
    %c2_19 = arith.constant 2 : index
    %43 = memref.load %arg3[%c2_18, %c2_19] : memref<3x3xf32, #tpu.memory_space<smem>>
    %44 = vector.extract_strided_slice %3 {offsets = [2, 2], sizes = [8, 6], strides = [1, 1]} : vector<16x8xf32> to vector<8x6xf32>
    %45 = vector.broadcast %43 : f32 to vector<8x6xf32>
    %46 = arith.mulf %45, %44 : vector<8x6xf32>
    %47 = arith.addf %42, %46 : vector<8x6xf32>
    %48 = vector.broadcast %0 : f32 to vector<8x6xf32>
    %49 = arith.addf %47, %48 : vector<8x6xf32>
    %c0_20 = arith.constant 0 : index
    %c0_21 = arith.constant 0 : index
    %50 = vector.load %arg5[%c0_20, %c0_21] : memref<8x6xf32, #tpu.memory_space<vmem>>, vector<8x6xf32>
    tpu.vector_store %arg5[%c0_20, %c0_21], %49 {strides = array<i32>} : memref<8x6xf32, #tpu.memory_space<vmem>>, vector<8x6xf32>,
    return
  }
  func.func @transform_0(%arg0: i32) -> (i32, i32) {
    %c0_i32 = arith.constant 0 : i32
    %c0_i32_0 = arith.constant 0 : i32
    return %arg0, %c0_i32 : i32, i32
  }
  func.func @transform_1(%arg0: i32) -> (i32, i32) {
    %c1_i32 = arith.constant 1 : i32
    %0 = arith.addi %arg0, %c1_i32 : i32
    %c1_i32_0 = arith.constant 1 : i32
    %1 = arith.muli %0, %c1_i32_0 : i32
    %c0_i32 = arith.constant 0 : i32
    %2 = arith.minsi %1, %c0_i32 : i32
    %c0_i32_1 = arith.constant 0 : i32
    %c0_i32_2 = arith.constant 0 : i32
    return %2, %c0_i32_1 : i32, i32
  }
  func.func @transform_2(%arg0: i32) -> (i32, i32) {
    %c0_i32 = arith.constant 0 : i32
    %c0_i32_0 = arith.constant 0 : i32
    %c0_i32_1 = arith.constant 0 : i32
    return %c0_i32, %c0_i32_0 : i32, i32
  }
  func.func @transform_3(%arg0: i32) -> i32 {
    %c0_i32 = arith.constant 0 : i32
    %c0_i32_0 = arith.constant 0 : i32
    return %c0_i32 : i32
  }
  func.func @transform_4(%arg0: i32) -> (i32, i32) {
    %c0_i32 = arith.constant 0 : i32
    %c0_i32_0 = arith.constant 0 : i32
    return %arg0, %c0_i32 : i32, i32
  }
}

</mosaic_0001>

<llo_original>
// kernel: tpu_custom_call.1
$region0: #{tpu_custom_call.1}
  #allocation0 [shape = 'u32[]', space=smem, size = 0x4, offset = 0x4, fixed_abs, tag = 'smem constant byte address 0x4 - core index']
  #allocation1 [shape = 'u32[144,128]{1,0:T(1,128)}', space=vmem, size = 0x12000, scoped, tag = 'internal scratch']
  #allocation2 [shape = 'f32[1]{0:T(128)S(6)}', space=smem, size = 0x200, scoped, tag = 'scoped memory for tpu_custom_call.1']
  %s0 = inlined_call_operand.hbm [shape: f32[8,8], index: 0, kind: input, shape index: {}]
  %s1 = inlined_call_operand.hbm [shape: f32[8,8], index: 1, kind: input, shape index: {}]
  %s2 = inlined_call_operand.vmem [shape: f32[3,3], index: 2, kind: input, shape index: {}]
  %s3 = inlined_call_operand.<no memory space> [shape: f32[1], index: 3, kind: input, shape index: {}]
  %s4 = inlined_call_operand.hbm [shape: f32[6,6], index: 4, kind: output, shape index: {}]
  %s5 = sld [smem:[#allocation0]]
  $region38: #{tpu_custom_call.1} parent=0
    _
  %s7 = ssub.s32 1, %s5
  %s8 = scalar_select 0, %s7, %s5
  %9 = sst [smem:[#allocation2]] %s3
  $region1: #{tpu_custom_call.1} parent=0
    #allocation3 [shape = 'u8[4096]{0}', space=vmem, size = 0x1000, scoped, tag = 'input window, operand 0, single buffered']
    #allocation4 [shape = 's32[1]{0}', space=sflag, size = 0x4, scoped, tag = 'scoped memory for tpu_custom_call.1']
    #allocation5 [shape = 's32[1]{0}', space=sflag, size = 0x4, scoped, tag = 'scoped memory for tpu_custom_call.1']
    #allocation6 [shape = 's32[1]{0}', space=sflag, size = 0x4, scoped, tag = 'scoped memory for tpu_custom_call.1']
    #allocation7 [shape = 'u8[4096]{0}', space=vmem, size = 0x1000, scoped, tag = 'input window, operand 1, single buffered']
    #allocation8 [shape = 's32[1]{0}', space=sflag, size = 0x4, scoped, tag = 'scoped memory for tpu_custom_call.1']
    #allocation9 [shape = 'u8[2048]{0}', space=smem, size = 0x800, scoped, tag = 'input window, operand 2, single buffered']
    #allocation10 [shape = 'u8[4096]{0}', space=vmem, size = 0x1000, scoped, tag = 'output window, operand 0, single buffered']
    %10 = vsyncpa [#allocation4], 0
    %11 = vsyncpa [#allocation8], 0
    %12 = vsyncpa [#allocation6], 0
    %13 = vsyncpa [#allocation5], 0
    // Predicated region
    $region2: #{tpu_custom_call.1} parent=1 // pred_check
      _
    $region3: #{tpu_custom_call.1} parent=1 // pred_check_branch
      %15 = sbr.rel (0) target = $region5
    $region4: #{tpu_custom_call.1} parent=1 // pred_region
      %s17 = ssub.s32 128, 128
      %18 = vsyncadd [#allocation4], %s17
      %s20 = sshll.u32 [#allocation3], 4
      %s21 = int_to_ptr.vmem [resolvable:$true] %s20
      %23 = dma.hbm_to_vmem [thread:$0]  %s0, 128, %s21, [#allocation4]
    $region5: #{tpu_custom_call.1} parent=1 // pred_fallthru
      _
    // Predicated region
    $region6: #{tpu_custom_call.1} parent=1 // pred_check
      _
    $region7: #{tpu_custom_call.1} parent=1 // pred_check_branch
      %25 = sbr.rel (0) target = $region9
    $region8: #{tpu_custom_call.1} parent=1 // pred_region
      %s26 = sadd.s32 0, 1
      %p27 = scmp.lt.s32.totalorder %s26, 0
      %s28 = scalar_select %p27, %s26, 0
      %s30 = ssub.s32 128, 128
      %31 = vsyncadd [#allocation8], %s30
      %s32 = smul.addr %s28, 128
      %s33 = scalar_lea.hbm %s1, %s32
      %s35 = sshll.u32 [#allocation7], 4
      %s36 = int_to_ptr.vmem [resolvable:$true] %s35
      %38 = dma.hbm_to_vmem [thread:$0]  %s33, 128, %s36, [#allocation8]
    $region9: #{tpu_custom_call.1} parent=1 // pred_fallthru
      _
    // Predicated region
    $region10: #{tpu_custom_call.1} parent=1 // pred_check
      _
    $region11: #{tpu_custom_call.1} parent=1 // pred_check_branch
      %40 = sbr.rel (0) target = $region13
    $region12: #{tpu_custom_call.1} parent=1 // pred_region
      %s42 = ssub.s32 64, 64
      %43 = vsyncadd [#allocation6], %s42
      %s45 = sshll.u32 %s2, 4
      %s46 = int_to_ptr.vmem [resolvable:$true] %s45
      %48 = dma.vmem_to_smem %s46, 64, [#allocation9], [#allocation6]
    $region13: #{tpu_custom_call.1} parent=1 // pred_fallthru
      _
    // Predicated region
    $region14: #{tpu_custom_call.1} parent=1 // pred_check
      _
    $region15: #{tpu_custom_call.1} parent=1 // pred_check_branch
      %50 = sbr.rel (0) target = $region17
    $region16: #{tpu_custom_call.1} parent=1 // pred_region
      _
    $region17: #{tpu_custom_call.1} parent=1 // pred_fallthru
      _
    // Predicated region
    $region18: #{tpu_custom_call.1} parent=1 // pred_check
      _
    $region19: #{tpu_custom_call.1} parent=1 // pred_check_branch
      %52 = sbr.rel (0) target = $region21
    $region20: #{tpu_custom_call.1} parent=1 // pred_region
      %53 = dma.done [#allocation4], 128
    $region21: #{tpu_custom_call.1} parent=1 // pred_fallthru
      _
    // Predicated region
    $region22: #{tpu_custom_call.1} parent=1 // pred_check
      _
    $region23: #{tpu_custom_call.1} parent=1 // pred_check_branch
      %55 = sbr.rel (0) target = $region25
    $region24: #{tpu_custom_call.1} parent=1 // pred_region
      %56 = dma.done [#allocation8], 128
    $region25: #{tpu_custom_call.1} parent=1 // pred_fallthru
      _
    // Predicated region
    $region26: #{tpu_custom_call.1} parent=1 // pred_check
      _
    $region27: #{tpu_custom_call.1} parent=1 // pred_check_branch
      %58 = sbr.rel (0) target = $region29
    $region28: #{tpu_custom_call.1} parent=1 // pred_region
      %59 = dma.done [#allocation6], 64
    $region29: #{tpu_custom_call.1} parent=1 // pred_fallthru
      _
    %60 = sfence
    %s61 = sadd.s32 0, 1
    %p62 = scmp.lt.s32.totalorder %s61, 0
    %s63 = scalar_select %p62, %s61, 0
    %s64 = sld [smem:[#allocation2]]
    %v65 = vld [vmem:[#allocation3] sm:$0xff]
    %v66 = vld [vmem:[#allocation7] sm:$0xff]
    %s67 = sld [smem:[#allocation9]]
    %v68 = vstv %s67
    %v69 = vmul.f32 %v68, %v65
    %s70 = sld [smem:[#allocation9 + $0x1]]
    %v71 = vstv %s70
    %v72 = vmul.f32 %v71, %v65
    %74 = vrot.lane.b32.xlu0 %v72, 127
    %v75 = vpop.permute.xlu0 %74
    %v77 = vadd.f32 %v69, %v75
    %s78 = sld [smem:[#allocation9 + $0x2]]
    %v79 = vstv %s78
    %v80 = vmul.f32 %v79, %v65
    %82 = vrot.lane.b32.xlu0 %v80, 126
    %v83 = vpop.permute.xlu0 %82
    %v85 = vadd.f32 %v77, %v83
    %s86 = sld [smem:[#allocation9 + $0x80]]
    %v87 = vstv %s86
    %v88 = vmul.f32 %v87, %v65
    %v89 = vmul.f32 %v87, %v66
    %vm92 = vcmask 1046528
    %v93 = vrot.slane %v88, 1
    %v94 = vrot.slane %v89, 1
    %v95 = vsel %vm92, %v93, %v94
    %v97 = vadd.f32 %v85, %v95
    %s98 = sld [smem:[#allocation9 + $0x81]]
    %v99 = vstv %s98
    %v100 = vmul.f32 %v99, %v65
    %v101 = vmul.f32 %v99, %v66
    %v104 = vrot.slane %v100, 1
    %v105 = vrot.slane %v101, 1
    %v106 = vsel %vm92, %v104, %v105
    %107 = vrot.lane.b32.xlu0 %v106, 127
    %v108 = vpop.permute.xlu0 %107
    %v110 = vadd.f32 %v97, %v108
    %s111 = sld [smem:[#allocation9 + $0x82]]
    %v112 = vstv %s111
    %v113 = vmul.f32 %v112, %v65
    %v114 = vmul.f32 %v112, %v66
    %v117 = vrot.slane %v113, 1
    %v118 = vrot.slane %v114, 1
    %v119 = vsel %vm92, %v117, %v118
    %120 = vrot.lane.b32.xlu0 %v119, 126
    %v121 = vpop.permute.xlu0 %120
    %v123 = vadd.f32 %v110, %v121
    %s124 = sld [smem:[#allocation9 + $0x100]]
    %v125 = vstv %s124
    %v126 = vmul.f32 %v125, %v65
    %v127 = vmul.f32 %v125, %v66
    %vm130 = vcmask 1045504
    %v131 = vrot.slane %v126, 2
    %v132 = vrot.slane %v127, 2
    %v133 = vsel %vm130, %v131, %v132
    %v135 = vadd.f32 %v123, %v133
    %s136 = sld [smem:[#allocation9 + $0x101]]
    %v137 = vstv %s136
    %v138 = vmul.f32 %v137, %v65
    %v139 = vmul.f32 %v137, %v66
    %v142 = vrot.slane %v138, 2
    %v143 = vrot.slane %v139, 2
    %v144 = vsel %vm130, %v142, %v143
    %145 = vrot.lane.b32.xlu0 %v144, 127
    %v146 = vpop.permute.xlu0 %145
    %v148 = vadd.f32 %v135, %v146
    %s149 = sld [smem:[#allocation9 + $0x102]]
    %v150 = vstv %s149
    %v151 = vmul.f32 %v150, %v65
    %v152 = vmul.f32 %v150, %v66
    %v155 = vrot.slane %v151, 2
    %v156 = vrot.slane %v152, 2
    %v157 = vsel %vm130, %v155, %v156
    %158 = vrot.lane.b32.xlu0 %v157, 126
    %v159 = vpop.permute.xlu0 %158
    %v161 = vadd.f32 %v148, %v159
    %v162 = vstv %s64
    %v163 = vadd.f32 %v161, %v162
    %vm164 = vcmask 48128
    %165 = vst.msk [vmem:[#allocation10] sm:$0xff] %vm164, %v163
    // Predicated region
    $region30: #{tpu_custom_call.1} parent=1 // pred_check
      _
    $region31: #{tpu_custom_call.1} parent=1 // pred_check_branch
      %167 = sbr.rel (0) target = $region33
    $region32: #{tpu_custom_call.1} parent=1 // pred_region
      %s169 = ssub.s32 128, 128
      %170 = vsyncadd [#allocation5], %s169
      %s172 = sshll.u32 [#allocation10], 4
      %s173 = int_to_ptr.vmem [resolvable:$true] %s172
      %175 = dma.vmem_to_hbm [thread:$0]  %s173, 128, %s4, [#allocation5]
    $region33: #{tpu_custom_call.1} parent=1 // pred_fallthru
      _
    // Predicated region
    $region34: #{tpu_custom_call.1} parent=1 // pred_check
      _
    $region35: #{tpu_custom_call.1} parent=1 // pred_check_branch
      %177 = sbr.rel (0) target = $region37
    $region36: #{tpu_custom_call.1} parent=1 // pred_region
      %178 = dma.done [#allocation5], 128
    $region37: #{tpu_custom_call.1} parent=1 // pred_fallthru
      _
    %179 = vsyncpa [#allocation4], 1
    %180 = vsyncpa [#allocation8], 1
    %181 = vsyncpa [#allocation5], 1
    %182 = vsyncpa [#allocation6], 1

</llo_original>
